<compile_context>
chip_gen: v6e
topology: v6e:2x2x1
jax: 0.10.0
libtpu: 0.0.40
codegen_flags: <defaults>
</compile_context>

<pallas_src>
import jax
import jax.numpy as jnp
from jax.experimental import pallas as pl
from jax.experimental.pallas import tpu as pltpu


def _round_up(x, m):
    return ((x + m - 1) // m) * m


def _choose_tile(b):
    """One grid step for small batches; otherwise >=2 steps (v7x megacore),
    capped at 2048 rows (~8 MiB/step double-buffered -> safe on all gens)."""
    if b < 128:
        return b
    return min(2048, _round_up(-(-b // 2), 8))


def _mlp_kernel(h1i_ref, m12_ref, w1m_ref, w2_ref, b2_ref, w3_ref, b3_ref, o_ref):
    """Fused 3-layer MLP.  Layer 1 = single bf16 matmul over concatenated
    monster features; the one-hot(goal)@W1 + b1 contribution arrives
    pre-gathered (exact, f32) in h1i_ref."""
    h1 = jnp.dot(m12_ref[...], w1m_ref[...], preferred_element_type=jnp.float32)
    h1 = jnp.maximum(h1 + h1i_ref[...], 0.0)

    h2 = jnp.dot(h1.astype(jnp.bfloat16), w2_ref[...],
                 preferred_element_type=jnp.float32)
    h2 = jnp.maximum(h2 + b2_ref[...], 0.0)

    out = jnp.dot(h2.astype(jnp.bfloat16), w3_ref[...],
                  preferred_element_type=jnp.float32)
    o_ref[...] = (out + b3_ref[...]).astype(o_ref.dtype)


@jax.jit
def question_answer_q_forward(goal, monster1, monster2, params):
    """goal: int [B]; monster1/monster2: [B, goal_size*q_size*2] each."""
    w1, b1, w2, b2, w3, b3 = params
    m_dim = monster1.shape[-1]
    goal_size = w1.shape[0] - 2 * m_dim
    hidden = w1.shape[1]
    out_size = w3.shape[1]
    B = goal.shape[0]

    # Fold one_hot(goal) @ W1[:goal_size] + b1 into an exact row gather (no MXU work).
    h1init = w1[:goal_size][goal.astype(jnp.int32)] + b1           # [B, hidden] f32

    # Single concatenated monster activation; bf16 operands for the MXU.
    m12 = jnp.concatenate([monster1, monster2], axis=-1).astype(jnp.bfloat16)
    w1m = w1[goal_size:].astype(jnp.bfloat16)                      # [2*m_dim, hidden]
    w2b = w2.astype(jnp.bfloat16)
    w3b = w3.astype(jnp.bfloat16)

    tb = _choose_tile(B)
    grid = (pl.cdiv(B, tb),)                 # ragged last block: no batch padding
    const = lambda i: (0, 0)

    return pl.pallas_call(
        _mlp_kernel,
        out_shape=jax.ShapeDtypeStruct((B, out_size), jnp.float32),
        grid_spec=pltpu.PrefetchScalarGridSpec(
            num_scalar_prefetch=0,
            grid=grid,
            in_specs=[
                pl.BlockSpec((tb, hidden), lambda i: (i, 0)),       # h1 initializer
                pl.BlockSpec((tb, 2 * m_dim), lambda i: (i, 0)),    # monster1||monster2
                pl.BlockSpec((2 * m_dim, hidden), const),           # W1 monster slice
                pl.BlockSpec((hidden, hidden), const),              # W2
                pl.BlockSpec((1, hidden), const),                   # b2
                pl.BlockSpec((hidden, out_size), const),            # W3
                pl.BlockSpec((1, out_size), const),                 # b3
            ],
            out_specs=pl.BlockSpec((tb, out_size), lambda i: (i, 0)),
        ),
        compiler_params=pltpu.CompilerParams(
            dimension_semantics=("parallel",),
        ),
    )(h1init, m12, w1m, w2b, b2, w3b, b3)


def init_params(key, goal_size, q_size, hidden=32, out_size=None):
    """Deterministic synthetic init (PyTorch-Linear-style uniform(-1/sqrt(fan_in), ..))."""
    if out_size is None:
        out_size = 2 + 2 * q_size * goal_size
    f_in = goal_size * q_size * 4 + goal_size

    def linear(key, fan_in, fan_out):
        kw, kb = jax.random.split(key)
        bound = 1.0 / jnp.sqrt(fan_in)
        w = jax.random.uniform(kw, (fan_in, fan_out), jnp.float32, -bound, bound)
        b = jax.random.uniform(kb, (1, fan_out), jnp.float32, -bound, bound)
        return w, b

    k1, k2, k3 = jax.random.split(key, 3)
    w1, b1 = linear(k1, f_in, hidden)
    w2, b2 = linear(k2, hidden, hidden)
    w3, b3 = linear(k3, hidden, out_size)
    return (w1, b1, w2, b2, w3, b3)


def _reference(goal, m1, m2, params):
    """Pure-f32 reference matching the PyTorch forward."""
    w1, b1, w2, b2, w3, b3 = params
    goal_size = w1.shape[0] - m1.shape[-1] - m2.shape[-1]
    x = jnp.concatenate(
        [jax.nn.one_hot(goal, goal_size, dtype=jnp.float32),
         m1.astype(jnp.float32), m2.astype(jnp.float32)], axis=-1)
    h1 = jnp.maximum(x @ w1 + b1, 0.0)
    h2 = jnp.maximum(h1 @ w2 + b2, 0.0)
    return h2 @ w3 + b3


if __name__ == "__main__":
    goal_size = 4
    q_size = 2
    B = 16

    key = jax.random.PRNGKey(0)
    kp, kg, k1, k2 = jax.random.split(key, 4)

    params = init_params(kp, goal_size, q_size)

    # obs['goal'] : integer per batch element in [0, goal_size)
    goal = jax.random.randint(kg, (B,), 0, goal_size, dtype=jnp.int32)
    # obs['monster1'] / obs['monster2'] : each [B, goal_size*q_size*2]
    m_dim = goal_size * q_size * 2
    monster1 = jax.random.normal(k1, (B, m_dim), dtype=jnp.float32)
    monster2 = jax.random.normal(k2, (B, m_dim), dtype=jnp.float32)

    out = question_answer_q_forward(goal, monster1, monster2, params)
    out = jax.block_until_ready(out)

    ref = _reference(goal, monster1, monster2, params)
    assert out.shape == (B, 2 + 2 * q_size * goal_size), out.shape
    # bf16 MXU operands (f32 accumulation) vs. pure-f32 reference -> relaxed tol.
    assert jnp.allclose(out, ref, atol=5e-2, rtol=5e-2), (
        "mismatch vs reference, max abs err %s" % jnp.max(jnp.abs(out - ref)))

    print("KERNEL_OK")
</pallas_src>

<mosaic_0001>
module attributes {stable_mosaic.version = 11 : i64} {
  func.func @_mlp_kernel(%arg0: i32, %arg1: memref<16x32xf32, #tpu.memory_space<vmem>>, %arg2: memref<16x32xbf16, #tpu.memory_space<vmem>>, %arg3: memref<32x32xbf16, #tpu.memory_space<vmem>>, %arg4: memref<32x32xbf16, #tpu.memory_space<vmem>>, %arg5: memref<1x32xf32, #tpu.memory_space<vmem>>, %arg6: memref<32x18xbf16, #tpu.memory_space<vmem>>, %arg7: memref<1x18xf32, #tpu.memory_space<vmem>>, %arg8: memref<16x18xf32, #tpu.memory_space<vmem>>) attributes {dimension_semantics = [#tpu.dimension_semantics<parallel>], iteration_bounds = array<i64: 1>, scalar_prefetch = 0 : i64, scratch_operands = 0 : i64, tpu.core_type = #tpu.core_type<tc>, window_params = [{transform_indices = @transform_0, window_bounds = array<i64: 16, 32>}, {transform_indices = @transform_1, window_bounds = array<i64: 16, 32>}, {pipeline_mode = #tpu.pipeline_mode<synchronous>, transform_indices = @transform_2, window_bounds = array<i64: 32, 32>}, {pipeline_mode = #tpu.pipeline_mode<synchronous>, transform_indices = @transform_3, window_bounds = array<i64: 32, 32>}, {pipeline_mode = #tpu.pipeline_mode<synchronous>, transform_indices = @transform_4, window_bounds = array<i64: 1, 32>}, {pipeline_mode = #tpu.pipeline_mode<synchronous>, transform_indices = @transform_5, window_bounds = array<i64: 32, 18>}, {pipeline_mode = #tpu.pipeline_mode<synchronous>, transform_indices = @transform_6, window_bounds = array<i64: 1, 18>}, {transform_indices = @transform_7, window_bounds = array<i64: 16, 18>}]} {
    %c0 = arith.constant 0 : index
    %c0_0 = arith.constant 0 : index
    %0 = vector.load %arg2[%c0, %c0_0] : memref<16x32xbf16, #tpu.memory_space<vmem>>, vector<16x32xbf16>
    %c0_1 = arith.constant 0 : index
    %c0_2 = arith.constant 0 : index
    %1 = vector.load %arg3[%c0_1, %c0_2] : memref<32x32xbf16, #tpu.memory_space<vmem>>, vector<32x32xbf16>
    %cst = arith.constant dense<0.000000e+00> : vector<16x32xf32>
    %2 = tpu.matmul %0, %1, %cst {dimension_numbers = #tpu.dot_dimension_numbers<[1], [0], [0], [1], [0, 0, 1, 1], [], []>} : vector<16x32xbf16>, vector<32x32xbf16>, vector<16x32xf32> -> vector<16x32xf32>
    %c0_3 = arith.constant 0 : index
    %c0_4 = arith.constant 0 : index
    %3 = vector.load %arg1[%c0_3, %c0_4] : memref<16x32xf32, #tpu.memory_space<vmem>>, vector<16x32xf32>
    %4 = arith.addf %2, %3 : vector<16x32xf32>
    %cst_5 = arith.constant 0.000000e+00 : f32
    %5 = vector.broadcast %cst_5 : f32 to vector<16x32xf32>
    %6 = arith.maximumf %4, %5 : vector<16x32xf32>
    %7 = arith.truncf %6 : vector<16x32xf32> to vector<16x32xbf16>
    %c0_6 = arith.constant 0 : index
    %c0_7 = arith.constant 0 : index
    %8 = vector.load %arg4[%c0_6, %c0_7] : memref<32x32xbf16, #tpu.memory_space<vmem>>, vector<32x32xbf16>
    %cst_8 = arith.constant dense<0.000000e+00> : vector<16x32xf32>
    %9 = tpu.matmul %7, %8, %cst_8 {dimension_numbers = #tpu.dot_dimension_numbers<[1], [0], [0], [1], [0, 0, 1, 1], [], []>} : vector<16x32xbf16>, vector<32x32xbf16>, vector<16x32xf32> -> vector<16x32xf32>
    %c0_9 = arith.constant 0 : index
    %c0_10 = arith.constant 0 : index
    %10 = vector.load %arg5[%c0_9, %c0_10] : memref<1x32xf32, #tpu.memory_space<vmem>>, vector<1x32xf32>
    %11 = vector.broadcast %10 : vector<1x32xf32> to vector<16x32xf32>
    %12 = arith.addf %9, %11 : vector<16x32xf32>
    %cst_11 = arith.constant 0.000000e+00 : f32
    %13 = vector.broadcast %cst_11 : f32 to vector<16x32xf32>
    %14 = arith.maximumf %12, %13 : vector<16x32xf32>
    %15 = arith.truncf %14 : vector<16x32xf32> to vector<16x32xbf16>
    %c0_12 = arith.constant 0 : index
    %c0_13 = arith.constant 0 : index
    %16 = vector.load %arg6[%c0_12, %c0_13] : memref<32x18xbf16, #tpu.memory_space<vmem>>, vector<32x18xbf16>
    %cst_14 = arith.constant dense<0.000000e+00> : vector<16x18xf32>
    %17 = tpu.matmul %15, %16, %cst_14 {dimension_numbers = #tpu.dot_dimension_numbers<[1], [0], [0], [1], [0, 0, 1, 1], [], []>} : vector<16x32xbf16>, vector<32x18xbf16>, vector<16x18xf32> -> vector<16x18xf32>
    %c0_15 = arith.constant 0 : index
    %c0_16 = arith.constant 0 : index
    %18 = vector.load %arg7[%c0_15, %c0_16] : memref<1x18xf32, #tpu.memory_space<vmem>>, vector<1x18xf32>
    %19 = vector.broadcast %18 : vector<1x18xf32> to vector<16x18xf32>
    %20 = arith.addf %17, %19 : vector<16x18xf32>
    %c0_17 = arith.constant 0 : index
    %c0_18 = arith.constant 0 : index
    %21 = vector.load %arg8[%c0_17, %c0_18] : memref<16x18xf32, #tpu.memory_space<vmem>>, vector<16x18xf32>
    tpu.vector_store %arg8[%c0_17, %c0_18], %20 {strides = array<i32>} : memref<16x18xf32, #tpu.memory_space<vmem>>, vector<16x18xf32>,
    return
  }
  func.func @transform_0(%arg0: i32) -> (i32, i32) {
    %c0_i32 = arith.constant 0 : i32
    %c0_i32_0 = arith.constant 0 : i32
    return %arg0, %c0_i32 : i32, i32
  }
  func.func @transform_1(%arg0: i32) -> (i32, i32) {
    %c0_i32 = arith.constant 0 : i32
    %c0_i32_0 = arith.constant 0 : i32
    return %arg0, %c0_i32 : i32, i32
  }
  func.func @transform_2(%arg0: i32) -> (i32, i32) {
    %c0_i32 = arith.constant 0 : i32
    %c0_i32_0 = arith.constant 0 : i32
    %c0_i32_1 = arith.constant 0 : i32
    return %c0_i32, %c0_i32_0 : i32, i32
  }
  func.func @transform_3(%arg0: i32) -> (i32, i32) {
    %c0_i32 = arith.constant 0 : i32
    %c0_i32_0 = arith.constant 0 : i32
    %c0_i32_1 = arith.constant 0 : i32
    return %c0_i32, %c0_i32_0 : i32, i32
  }
  func.func @transform_4(%arg0: i32) -> (i32, i32) {
    %c0_i32 = arith.constant 0 : i32
    %c0_i32_0 = arith.constant 0 : i32
    %c0_i32_1 = arith.constant 0 : i32
    return %c0_i32, %c0_i32_0 : i32, i32
  }
  func.func @transform_5(%arg0: i32) -> (i32, i32) {
    %c0_i32 = arith.constant 0 : i32
    %c0_i32_0 = arith.constant 0 : i32
    %c0_i32_1 = arith.constant 0 : i32
    return %c0_i32, %c0_i32_0 : i32, i32
  }
  func.func @transform_6(%arg0: i32) -> (i32, i32) {
    %c0_i32 = arith.constant 0 : i32
    %c0_i32_0 = arith.constant 0 : i32
    %c0_i32_1 = arith.constant 0 : i32
    return %c0_i32, %c0_i32_0 : i32, i32
  }
  func.func @transform_7(%arg0: i32) -> (i32, i32) {
    %c0_i32 = arith.constant 0 : i32
    %c0_i32_0 = arith.constant 0 : i32
    return %arg0, %c0_i32 : i32, i32
  }
}

</mosaic_0001>

<llo_original>
// kernel: question_answer_q_forward.1
$region0: #{question_answer_q_forward.1}
  #allocation0 [shape = 'u32[]', space=smem, size = 0x4, offset = 0x4, fixed_abs, tag = 'smem constant byte address 0x4 - core index']
  #allocation1 [shape = 'u32[144,128]{1,0:T(1,128)}', space=vmem, size = 0x12000, scoped, tag = 'internal scratch']
  %s0 = inlined_call_operand.vmem [shape: f32[16,32], index: 0, kind: input, shape index: {}]
  %s1 = inlined_call_operand.vmem [shape: bf16[16,32], index: 1, kind: input, shape index: {}]
  %s2 = inlined_call_operand.vmem [shape: bf16[32,32], index: 2, kind: input, shape index: {}]
  %s3 = inlined_call_operand.vmem [shape: bf16[32,32], index: 3, kind: input, shape index: {}]
  %s4 = inlined_call_operand.vmem [shape: f32[1,32], index: 4, kind: input, shape index: {}]
  %s5 = inlined_call_operand.vmem [shape: bf16[32,18], index: 5, kind: input, shape index: {}]
  %s6 = inlined_call_operand.vmem [shape: f32[1,18], index: 6, kind: input, shape index: {}]
  %s7 = inlined_call_operand.hbm [shape: f32[16,18], index: 7, kind: output, shape index: {}]
  %s8 = sld [smem:[#allocation0]]
  $region38: #{question_answer_q_forward.1} parent=0
    _
  %s10 = ssub.s32 1, %s8
  %s11 = scalar_select 0, %s10, %s8
  $region1: #{question_answer_q_forward.1} parent=0
    #allocation2 [shape = 'u8[8192]{0}', space=vmem, size = 0x2000, scoped, tag = 'output window, operand 0, single buffered']
    #allocation3 [shape = 's32[1]{0}', space=sflag, size = 0x4, scoped, tag = 'scoped memory for question_answer_q_forward.1']
    %12 = vsyncpa [#allocation3], 0
    // Predicated region
    $region2: #{question_answer_q_forward.1} parent=1 // pred_check
      _
    $region3: #{question_answer_q_forward.1} parent=1 // pred_check_branch
      %14 = sbr.rel (0) target = $region5
    $region4: #{question_answer_q_forward.1} parent=1 // pred_region
      _
    $region5: #{question_answer_q_forward.1} parent=1 // pred_fallthru
      _
    // Predicated region
    $region6: #{question_answer_q_forward.1} parent=1 // pred_check
      _
    $region7: #{question_answer_q_forward.1} parent=1 // pred_check_branch
      %16 = sbr.rel (0) target = $region9
    $region8: #{question_answer_q_forward.1} parent=1 // pred_region
      _
    $region9: #{question_answer_q_forward.1} parent=1 // pred_fallthru
      _
    // Predicated region
    $region10: #{question_answer_q_forward.1} parent=1 // pred_check
      _
    $region11: #{question_answer_q_forward.1} parent=1 // pred_check_branch
      %18 = sbr.rel (0) target = $region13
    $region12: #{question_answer_q_forward.1} parent=1 // pred_region
      _
    $region13: #{question_answer_q_forward.1} parent=1 // pred_fallthru
      _
    // Predicated region
    $region14: #{question_answer_q_forward.1} parent=1 // pred_check
      _
    $region15: #{question_answer_q_forward.1} parent=1 // pred_check_branch
      %20 = sbr.rel (0) target = $region17
    $region16: #{question_answer_q_forward.1} parent=1 // pred_region
      _
    $region17: #{question_answer_q_forward.1} parent=1 // pred_fallthru
      _
    // Predicated region
    $region18: #{question_answer_q_forward.1} parent=1 // pred_check
      _
    $region19: #{question_answer_q_forward.1} parent=1 // pred_check_branch
      %22 = sbr.rel (0) target = $region21
    $region20: #{question_answer_q_forward.1} parent=1 // pred_region
      _
    $region21: #{question_answer_q_forward.1} parent=1 // pred_fallthru
      _
    // Predicated region
    $region22: #{question_answer_q_forward.1} parent=1 // pred_check
      _
    $region23: #{question_answer_q_forward.1} parent=1 // pred_check_branch
      %24 = sbr.rel (0) target = $region25
    $region24: #{question_answer_q_forward.1} parent=1 // pred_region
      _
    $region25: #{question_answer_q_forward.1} parent=1 // pred_fallthru
      _
    // Predicated region
    $region26: #{question_answer_q_forward.1} parent=1 // pred_check
      _
    $region27: #{question_answer_q_forward.1} parent=1 // pred_check_branch
      %26 = sbr.rel (0) target = $region29
    $region28: #{question_answer_q_forward.1} parent=1 // pred_region
      _
    $region29: #{question_answer_q_forward.1} parent=1 // pred_fallthru
      _
    %v28 = vld [vmem:[%s1] sm:$0xf]
    %v29 = vld [vmem:[%s1 + $0x4] sm:$0xf]
    %v30 = vld [vmem:[%s2] sm:$0xf]
    %v31 = vld [vmem:[%s2 + $0x4] sm:$0xf]
    %v32 = vld [vmem:[%s2 + $0x8] sm:$0xf]
    %v33 = vld [vmem:[%s2 + $0xc] sm:$0xf]
    %v34 = vld [vmem:[%s0] sm:$0xff]
    %v35 = vld [vmem:[%s0 + $0x8] sm:$0xff]
    %v38 = vunpack.c.l.b16 %v28
    %v39 = vunpack.c.l.b16 %v29
    %v40 = vpack.c.b16 %v39, %v38
    %v45 = vunpack.c.l.b16 %v30
    %v46 = vunpack.c.l.b16 %v31
    %v47 = vunpack.c.l.b16 %v32
    %v48 = vunpack.c.l.b16 %v33
    %v49 = vpack.c.b16 %v46, %v45
    %v50 = vpack.c.b16 %v48, %v47
    %vm53 = vcmask 261120
    %v55 = vsel %vm53, %v40, 0
    %57 = vmatprep.subr.bf16.mxu0 0
    %58 = vmatpush1.bf16.msra.mxu0 0
    %59 = vmatprep.subr.bf16.mxu0 0
    %60 = vmatpush1.bf16.msra.mxu0 0
    %61 = vmatprep.subr.bf16.mxu0 0
    %62 = vmatpush1.bf16.msra.mxu0 0
    %63 = vmatprep.subr.bf16.mxu0 0
    %64 = vmatpush1.bf16.msra.mxu0 0
    %65 = vmatprep.subr.bf16.mxu0 0
    %66 = vmatpush1.bf16.msra.mxu0 0
    %67 = vmatprep.subr.bf16.mxu0 0
    %68 = vmatpush1.bf16.msra.mxu0 0
    %69 = vmatprep.subr.bf16.mxu0 0
    %70 = vmatpush1.bf16.msra.mxu0 %v50
    %71 = vmatprep.subr.bf16.mxu0 0
    %72 = vmatpush1.bf16.msra.mxu0 %v49
    %73 = vmatprep.subr.bf16.mxu0 0
    %74 = vmatpush2.bf16.msra.mxu0 0
    %75 = vmatprep.subr.bf16.mxu0 0
    %76 = vmatpush2.bf16.msra.mxu0 0
    %77 = vmatprep.subr.bf16.mxu0 0
    %78 = vmatpush2.bf16.msra.mxu0 0
    %79 = vmatprep.subr.bf16.mxu0 0
    %80 = vmatpush2.bf16.msra.mxu0 0
    %81 = vmatprep.subr.bf16.mxu0 0
    %82 = vmatpush2.bf16.msra.mxu0 0
    %83 = vmatprep.subr.bf16.mxu0 0
    %84 = vmatpush2.bf16.msra.mxu0 0
    %85 = vmatprep.subr.bf16.mxu0 0
    %86 = vmatpush2.bf16.msra.mxu0 0
    %87 = vmatprep.subr.bf16.mxu0 0
    %88 = vmatpush2.bf16.msra.mxu0 0
    %89 = vmatprep.mubr.bf16.mxu0 0
    %90 = vmatmul.mubr.bf16.gmra.mxu0 %v55
    %v91 = vpop.f32.mrf.mxu0
    %v92 = vadd.f32 %v34, %v91
    %v93 = vpop.f32.mrf.mxu0
    %v94 = vpop.f32.mrf.mxu0
    %v95 = vadd.f32 %v35, %v94
    %v96 = vpop.f32.mrf.mxu0
    %97 = vdwg.mxu0
    %v98 = vmax.f32 %v92, 0.0
    %v99 = vmax.f32 %v95, 0.0
    %v100 = vpack.c.bf16 %v99, %v98
    %v101 = vld [vmem:[%s3] sm:$0xf]
    %v102 = vld [vmem:[%s3 + $0x4] sm:$0xf]
    %v103 = vld [vmem:[%s3 + $0x8] sm:$0xf]
    %v104 = vld [vmem:[%s3 + $0xc] sm:$0xf]
    %v105 = vld [vmem:[%s4] sm:$0x1]
    %v107 = vlaneseq
    %v108 = vshrl.u32 %v107, 7
    %v109 = vsub.s32 0, %v108
    %v110 = vrot.slane %v105, %v109
    %v116 = vunpack.c.l.b16 %v101
    %v117 = vunpack.c.l.b16 %v102
    %v118 = vunpack.c.l.b16 %v103
    %v119 = vunpack.c.l.b16 %v104
    %v120 = vpack.c.b16 %v117, %v116
    %v121 = vpack.c.b16 %v119, %v118
    %v125 = vsel %vm53, %v100, 0
    %127 = vmatprep.subr.bf16.mxu0 0
    %128 = vmatpush1.bf16.msra.mxu0 0
    %129 = vmatprep.subr.bf16.mxu0 0
    %130 = vmatpush1.bf16.msra.mxu0 0
    %131 = vmatprep.subr.bf16.mxu0 0
    %132 = vmatpush1.bf16.msra.mxu0 0
    %133 = vmatprep.subr.bf16.mxu0 0
    %134 = vmatpush1.bf16.msra.mxu0 0
    %135 = vmatprep.subr.bf16.mxu0 0
    %136 = vmatpush1.bf16.msra.mxu0 0
    %137 = vmatprep.subr.bf16.mxu0 0
    %138 = vmatpush1.bf16.msra.mxu0 0
    %139 = vmatprep.subr.bf16.mxu0 0
    %140 = vmatpush1.bf16.msra.mxu0 %v121
    %141 = vmatprep.subr.bf16.mxu0 0
    %142 = vmatpush1.bf16.msra.mxu0 %v120
    %143 = vmatprep.subr.bf16.mxu0 0
    %144 = vmatpush2.bf16.msra.mxu0 0
    %145 = vmatprep.subr.bf16.mxu0 0
    %146 = vmatpush2.bf16.msra.mxu0 0
    %147 = vmatprep.subr.bf16.mxu0 0
    %148 = vmatpush2.bf16.msra.mxu0 0
    %149 = vmatprep.subr.bf16.mxu0 0
    %150 = vmatpush2.bf16.msra.mxu0 0
    %151 = vmatprep.subr.bf16.mxu0 0
    %152 = vmatpush2.bf16.msra.mxu0 0
    %153 = vmatprep.subr.bf16.mxu0 0
    %154 = vmatpush2.bf16.msra.mxu0 0
    %155 = vmatprep.subr.bf16.mxu0 0
    %156 = vmatpush2.bf16.msra.mxu0 0
    %157 = vmatprep.subr.bf16.mxu0 0
    %158 = vmatpush2.bf16.msra.mxu0 0
    %159 = vmatprep.mubr.bf16.mxu0 0
    %160 = vmatmul.mubr.bf16.gmra.mxu0 %v125
    %v161 = vpop.f32.mrf.mxu0
    %v162 = vadd.f32 %v110, %v161
    %v163 = vpop.f32.mrf.mxu0
    %v164 = vpop.f32.mrf.mxu0
    %v165 = vadd.f32 %v110, %v164
    %v166 = vpop.f32.mrf.mxu0
    %167 = vdwg.mxu0
    %v168 = vmax.f32 %v162, 0.0
    %v169 = vmax.f32 %v165, 0.0
    %v170 = vpack.c.bf16 %v169, %v168
    %v171 = vld [vmem:[%s5] sm:$0xf]
    %v172 = vld [vmem:[%s5 + $0x4] sm:$0xf]
    %v173 = vld [vmem:[%s5 + $0x8] sm:$0xf]
    %v174 = vld [vmem:[%s5 + $0xc] sm:$0xf]
    %v175 = vld [vmem:[%s6] sm:$0x1]
    %v177 = vlaneseq
    %v178 = vshrl.u32 %v177, 7
    %v179 = vsub.s32 0, %v178
    %v180 = vrot.slane %v175, %v179
    %v186 = vunpack.c.l.b16 %v171
    %v187 = vunpack.c.l.b16 %v172
    %v188 = vunpack.c.l.b16 %v173
    %v189 = vunpack.c.l.b16 %v174
    %v190 = vpack.c.b16 %v187, %v186
    %v191 = vpack.c.b16 %v189, %v188
    %v195 = vsel %vm53, %v170, 0
    %197 = vmatprep.subr.bf16.mxu0 0
    %198 = vmatpush1.bf16.msra.mxu0 0
    %199 = vmatprep.subr.bf16.mxu0 0
    %200 = vmatpush1.bf16.msra.mxu0 0
    %201 = vmatprep.subr.bf16.mxu0 0
    %202 = vmatpush1.bf16.msra.mxu0 0
    %203 = vmatprep.subr.bf16.mxu0 0
    %204 = vmatpush1.bf16.msra.mxu0 0
    %205 = vmatprep.subr.bf16.mxu0 0
    %206 = vmatpush1.bf16.msra.mxu0 0
    %207 = vmatprep.subr.bf16.mxu0 0
    %208 = vmatpush1.bf16.msra.mxu0 0
    %209 = vmatprep.subr.bf16.mxu0 0
    %210 = vmatpush1.bf16.msra.mxu0 %v191
    %211 = vmatprep.subr.bf16.mxu0 0
    %212 = vmatpush1.bf16.msra.mxu0 %v190
    %213 = vmatprep.subr.bf16.mxu0 0
    %214 = vmatpush2.bf16.msra.mxu0 0
    %215 = vmatprep.subr.bf16.mxu0 0
    %216 = vmatpush2.bf16.msra.mxu0 0
    %217 = vmatprep.subr.bf16.mxu0 0
    %218 = vmatpush2.bf16.msra.mxu0 0
    %219 = vmatprep.subr.bf16.mxu0 0
    %220 = vmatpush2.bf16.msra.mxu0 0
    %221 = vmatprep.subr.bf16.mxu0 0
    %222 = vmatpush2.bf16.msra.mxu0 0
    %223 = vmatprep.subr.bf16.mxu0 0
    %224 = vmatpush2.bf16.msra.mxu0 0
    %225 = vmatprep.subr.bf16.mxu0 0
    %226 = vmatpush2.bf16.msra.mxu0 0
    %227 = vmatprep.subr.bf16.mxu0 0
    %228 = vmatpush2.bf16.msra.mxu0 0
    %229 = vmatprep.mubr.bf16.mxu0 0
    %230 = vmatmul.mubr.bf16.gmra.mxu0 %v195
    %v231 = vpop.f32.mrf.mxu0
    %v232 = vadd.f32 %v180, %v231
    %v233 = vpop.f32.mrf.mxu0
    %v234 = vpop.f32.mrf.mxu0
    %v235 = vadd.f32 %v180, %v234
    %v236 = vpop.f32.mrf.mxu0
    %237 = vdwg.mxu0
    %vm238 = vcmask 146432
    %239 = vst.msk [vmem:[#allocation2] sm:$0xff] %vm238, %v232
    %240 = vst.msk [vmem:[#allocation2 + $0x8] sm:$0xff] %vm238, %v235
    // Predicated region
    $region30: #{question_answer_q_forward.1} parent=1 // pred_check
      _
    $region31: #{question_answer_q_forward.1} parent=1 // pred_check_branch
      %242 = sbr.rel (0) target = $region33
    $region32: #{question_answer_q_forward.1} parent=1 // pred_region
      %s244 = ssub.s32 256, 256
      %245 = vsyncadd [#allocation3], %s244
      %s246 = sshll.u32 [#allocation2], 4
      %s247 = int_to_ptr.vmem [resolvable:$true] %s246
      %252 = dma.vmem_to_hbm [thread:$0]  %s247, 256, %s7, [#allocation3], 128, 128, 8
    $region33: #{question_answer_q_forward.1} parent=1 // pred_fallthru
      _
    // Predicated region
    $region34: #{question_answer_q_forward.1} parent=1 // pred_check
      _
    $region35: #{question_answer_q_forward.1} parent=1 // pred_check_branch
      %254 = sbr.rel (0) target = $region37
    $region36: #{question_answer_q_forward.1} parent=1 // pred_region
      %255 = dma.done [#allocation3], 256
    $region37: #{question_answer_q_forward.1} parent=1 // pred_fallthru
      _
    %256 = vsyncpa [#allocation3], 1

</llo_original>
